<compile_context>
chip_gen: v6e
topology: v6e:2x2x1
jax: 0.10.0
libtpu: 0.0.40
codegen_flags: <defaults>
</compile_context>

<pallas_src>
import math

import jax
import jax.numpy as jnp
from jax import lax
from jax.experimental import pallas as pl
from jax.experimental.pallas import tpu as pltpu


# ---------------------------------------------------------------------------
# Pass 1: K / V projections (Q is fused into pass 2).
# ---------------------------------------------------------------------------
def _kv_projection_kernel(x_ref, wkv_ref, k_ref, v_ref):
    # x_ref: (tp, dim_q) f32;  wkv_ref: (dim_q, dim_k + dim_v) bf16.
    # One wide matmul (N = dim_k + dim_v) -> two lane-aligned stores.
    x = x_ref[...].astype(jnp.bfloat16)
    kv = jnp.dot(x, wkv_ref[...], preferred_element_type=jnp.float32)
    dim_k = k_ref.shape[-1]
    k_ref[...] = kv[:, :dim_k].astype(k_ref.dtype)
    v_ref[...] = kv[:, dim_k:].astype(v_ref.dtype)


# ---------------------------------------------------------------------------
# Pass 2: flash attention with online softmax and fused Q projection.
# ---------------------------------------------------------------------------
def _flash_attention_kernel(x_ref, wq_ref, k_ref, v_ref, o_ref,
                            q_sc, m_sc, l_sc, acc_sc):
    # x_ref: (tq, dim_q) f32, wq_ref: (dim_q, dim_k) bf16 (carries 1/sqrt(dk)),
    # k_ref: (tkv, dim_k) bf16, v_ref: (tkv, dim_v) bf16, o_ref: (tq, dim_v) f32.
    ki = pl.program_id(2)

    @pl.when(ki == 0)
    def _():
        # Fused Q projection: computed once per (batch, q-tile), reused for
        # every kv step -> Q never hits HBM.
        x = x_ref[...].astype(jnp.bfloat16)
        q_sc[...] = jnp.dot(
            x, wq_ref[...], preferred_element_type=jnp.float32).astype(q_sc.dtype)
        m_sc[...] = jnp.full_like(m_sc, -jnp.inf)
        l_sc[...] = jnp.zeros_like(l_sc)
        acc_sc[...] = jnp.zeros_like(acc_sc)

    # scores: contract the last axis of q and k directly (no explicit k.T).
    s = lax.dot_general(
        q_sc[...], k_ref[...],
        dimension_numbers=(((1,), (1,)), ((), ())),
        preferred_element_type=jnp.float32,
    )  # (tq, tkv) f32

    m_prev = m_sc[...]
    m_new = jnp.maximum(m_prev, jnp.max(s, axis=-1, keepdims=True))
    alpha = jnp.exp(m_prev - m_new)                         # (tq, 1) f32
    # bf16 exp: ~2x EUP throughput on v6e/v7x (correct everywhere; v5e just
    # runs the f32 EUP path).  The row-sum for l is forced to f32 so the
    # softmax denominator keeps full precision.
    p = jnp.exp((s - m_new).astype(jnp.bfloat16))           # (tq, tkv) bf16

    l_sc[...] = alpha * l_sc[...] + jnp.sum(
        p, axis=-1, dtype=jnp.float32, keepdims=True)
    acc_sc[...] = alpha * acc_sc[...] + jnp.dot(
        p, v_ref[...], preferred_element_type=jnp.float32)
    m_sc[...] = m_new

    @pl.when(ki == pl.num_programs(2) - 1)
    def _():
        inv_l = pl.reciprocal(l_sc[...], approx=True)       # EUP slot, ~free
        o_ref[...] = (acc_sc[...] * inv_l).astype(o_ref.dtype)


# ---------------------------------------------------------------------------
# Wrapper
# ---------------------------------------------------------------------------
def self_attention(x, wq, wk, wv, *, q_tile=256, kv_tile=512, proj_tile=512):
    """Pallas self-attention matching the PyTorch SelfAttention forward.

    Args:
      x:  [batch, n, dim_q] float32
      wq: [dim_q, dim_k]  (transposed nn.Linear weight)
      wk: [dim_q, dim_k]
      wv: [dim_q, dim_v]
    Returns:
      [batch, n, dim_v] float32
    """
    batch, n, dim_q = x.shape
    dim_k = wq.shape[1]
    dim_v = wv.shape[1]
    norm_fact = 1.0 / math.sqrt(dim_k)

    tq = min(q_tile, n)
    tkv = min(kv_tile, n)
    tp = min(proj_tile, n)
    assert n % tq == 0 and n % tkv == 0 and n % tp == 0, \
        "sequence length must divide the tile sizes"
    # TODO(synk): no masked tail handling; seq length must divide the tiles.

    # Fold the softmax scale into Wq once (f32), cast MXU operands to bf16,
    # and concatenate Wk|Wv so pass 1 is a single wide matmul.
    wq_b = (wq * norm_fact).astype(jnp.bfloat16)
    wkv_b = jnp.concatenate([wk, wv], axis=1).astype(jnp.bfloat16)

    # ---- Pass 1: K / V projections (HBM-bound; large row tile) ---------------
    k, v = pl.pallas_call(
        _kv_projection_kernel,
        out_shape=(
            jax.ShapeDtypeStruct((batch, n, dim_k), jnp.bfloat16),
            jax.ShapeDtypeStruct((batch, n, dim_v), jnp.bfloat16),
        ),
        grid_spec=pltpu.PrefetchScalarGridSpec(
            num_scalar_prefetch=0,
            grid=(batch, n // tp),
            in_specs=[
                pl.BlockSpec((None, tp, dim_q), lambda b, i: (b, i, 0)),
                pl.BlockSpec((dim_q, dim_k + dim_v), lambda b, i: (0, 0)),
            ],
            out_specs=[
                pl.BlockSpec((None, tp, dim_k), lambda b, i: (b, i, 0)),
                pl.BlockSpec((None, tp, dim_v), lambda b, i: (b, i, 0)),
            ],
        ),
        compiler_params=pltpu.CompilerParams(
            dimension_semantics=("parallel", "parallel")),
    )(x, wkv_b)

    # ---- Pass 2: flash attention (Q projection fused in) ----------------------
    n_q = n // tq
    n_kv = n // tkv
    cost = pl.CostEstimate(
        flops=2 * batch * n * dim_q * dim_k              # fused Q projection
        + 2 * batch * n * n * (dim_k + dim_v),           # QK^T + PV
        transcendentals=batch * n * n,
        bytes_accessed=4 * batch * n * dim_q             # x q-tiles (f32)
        + 2 * batch * n * (dim_k + dim_v) * n_q          # K/V re-read per q tile
        + 4 * batch * n * dim_v,                         # output writeback (f32)
    )
    out = pl.pallas_call(
        _flash_attention_kernel,
        out_shape=jax.ShapeDtypeStruct((batch, n, dim_v), jnp.float32),
        grid_spec=pltpu.PrefetchScalarGridSpec(
            num_scalar_prefetch=0,
            grid=(batch, n_q, n_kv),
            in_specs=[
                pl.BlockSpec((None, tq, dim_q), lambda b, qi, ki: (b, qi, 0)),
                pl.BlockSpec((dim_q, dim_k), lambda b, qi, ki: (0, 0)),
                pl.BlockSpec((None, tkv, dim_k), lambda b, qi, ki: (b, ki, 0)),
                pl.BlockSpec((None, tkv, dim_v), lambda b, qi, ki: (b, ki, 0)),
            ],
            out_specs=pl.BlockSpec((None, tq, dim_v),
                                   lambda b, qi, ki: (b, qi, 0)),
            scratch_shapes=[
                pltpu.VMEM((tq, dim_k), jnp.bfloat16),   # fused q tile
                pltpu.VMEM((tq, 1), jnp.float32),        # running max m
                pltpu.VMEM((tq, 1), jnp.float32),        # running denom l
                pltpu.VMEM((tq, dim_v), jnp.float32),    # unnormalized acc
            ],
        ),
        compiler_params=pltpu.CompilerParams(
            dimension_semantics=("parallel", "parallel", "arbitrary")),
        cost_estimate=cost,
    )(x, wq_b, k, v)
    return out


def self_attention_ref(x, wq, wk, wv):
    """Pure-JAX reference matching the PyTorch module semantics."""
    dim_k = wq.shape[1]
    q = jnp.einsum("bnd,dk->bnk", x, wq)
    k = jnp.einsum("bnd,dk->bnk", x, wk)
    v = jnp.einsum("bnd,dv->bnv", x, wv)
    dist = jnp.einsum("bqk,bnk->bqn", q, k) * (1.0 / math.sqrt(dim_k))
    prob = jax.nn.softmax(dist, axis=-1)
    return jnp.einsum("bqn,bnv->bqv", prob, v)


if __name__ == "__main__":
    # Lane-dense shapes: feature dims are multiples of 128 so stores are
    # unmasked and the MXU runs full-width tiles.  n=1024 exercises multiple
    # q tiles (tq=256) and multiple kv steps (tkv=512) of the online softmax.
    batch, n, dim_q, dim_k, dim_v = 2, 1024, 128, 128, 128

    key = jax.random.PRNGKey(0)
    kx, kq, kk, kv = jax.random.split(key, 4)

    x = jax.random.normal(kx, (batch, n, dim_q), dtype=jnp.float32)
    bound = 1.0 / math.sqrt(dim_q)
    wq = jax.random.uniform(kq, (dim_q, dim_k), jnp.float32, -bound, bound)
    wk = jax.random.uniform(kk, (dim_q, dim_k), jnp.float32, -bound, bound)
    wv = jax.random.uniform(kv, (dim_q, dim_v), jnp.float32, -bound, bound)

    out = self_attention(x, wq, wk, wv)
    out = jax.block_until_ready(out)

    ref = self_attention_ref(x, wq, wk, wv)
    assert out.shape == (batch, n, dim_v)
    # bf16 MXU operands / bf16 exp with f32 accumulation -> relaxed tolerance.
    assert jnp.allclose(out, ref, atol=2e-2, rtol=2e-2), "mismatch vs reference"

    print("KERNEL_OK")
</pallas_src>

<mosaic_0001>
module attributes {stable_mosaic.version = 11 : i64} {
  func.func @_kv_projection_kernel(%arg0: i32, %arg1: i32, %arg2: memref<1x512x128xf32, #tpu.memory_space<vmem>>, %arg3: memref<128x256xbf16, #tpu.memory_space<vmem>>, %arg4: memref<1x512x128xbf16, #tpu.memory_space<vmem>>, %arg5: memref<1x512x128xbf16, #tpu.memory_space<vmem>>) attributes {dimension_semantics = [#tpu.dimension_semantics<parallel>, #tpu.dimension_semantics<parallel>], iteration_bounds = array<i64: 2, 2>, scalar_prefetch = 0 : i64, scratch_operands = 0 : i64, tpu.core_type = #tpu.core_type<tc>, window_params = [{transform_indices = @transform_0, window_bounds = array<i64: 1, 512, 128>}, {pipeline_mode = #tpu.pipeline_mode<synchronous>, transform_indices = @transform_1, window_bounds = array<i64: 128, 256>}, {transform_indices = @transform_2, window_bounds = array<i64: 1, 512, 128>}, {transform_indices = @transform_3, window_bounds = array<i64: 1, 512, 128>}]} {
    %c0 = arith.constant 0 : index
    %c0_0 = arith.constant 0 : index
    %c0_1 = arith.constant 0 : index
    %0 = vector.load %arg2[%c0, %c0_0, %c0_1] : memref<1x512x128xf32, #tpu.memory_space<vmem>>, vector<1x512x128xf32>
    %1 = vector.shape_cast %0 : vector<1x512x128xf32> to vector<512x128xf32>
    %2 = arith.truncf %1 : vector<512x128xf32> to vector<512x128xbf16>
    %c0_2 = arith.constant 0 : index
    %c0_3 = arith.constant 0 : index
    %3 = vector.load %arg3[%c0_2, %c0_3] : memref<128x256xbf16, #tpu.memory_space<vmem>>, vector<128x256xbf16>
    %cst = arith.constant dense<0.000000e+00> : vector<512x256xf32>
    %4 = tpu.matmul %2, %3, %cst {dimension_numbers = #tpu.dot_dimension_numbers<[1], [0], [0], [1], [0, 0, 1, 1], [], []>} : vector<512x128xbf16>, vector<128x256xbf16>, vector<512x256xf32> -> vector<512x256xf32>
    %5 = vector.extract_strided_slice %4 {offsets = [0, 0], sizes = [512, 128], strides = [1, 1]} : vector<512x256xf32> to vector<512x128xf32>
    %6 = arith.truncf %5 : vector<512x128xf32> to vector<512x128xbf16>
    %c0_4 = arith.constant 0 : index
    %c0_5 = arith.constant 0 : index
    %c0_6 = arith.constant 0 : index
    %7 = vector.load %arg4[%c0_4, %c0_5, %c0_6] : memref<1x512x128xbf16, #tpu.memory_space<vmem>>, vector<1x512x128xbf16>
    %8 = vector.shape_cast %7 : vector<1x512x128xbf16> to vector<512x128xbf16>
    %9 = vector.shape_cast %6 : vector<512x128xbf16> to vector<1x512x128xbf16>
    tpu.vector_store %arg4[%c0_4, %c0_5, %c0_6], %9 {strides = array<i32>} : memref<1x512x128xbf16, #tpu.memory_space<vmem>>, vector<1x512x128xbf16>,
    %10 = vector.extract_strided_slice %4 {offsets = [0, 128], sizes = [512, 128], strides = [1, 1]} : vector<512x256xf32> to vector<512x128xf32>
    %11 = arith.truncf %10 : vector<512x128xf32> to vector<512x128xbf16>
    %c0_7 = arith.constant 0 : index
    %c0_8 = arith.constant 0 : index
    %c0_9 = arith.constant 0 : index
    %12 = vector.load %arg5[%c0_7, %c0_8, %c0_9] : memref<1x512x128xbf16, #tpu.memory_space<vmem>>, vector<1x512x128xbf16>
    %13 = vector.shape_cast %12 : vector<1x512x128xbf16> to vector<512x128xbf16>
    %14 = vector.shape_cast %11 : vector<512x128xbf16> to vector<1x512x128xbf16>
    tpu.vector_store %arg5[%c0_7, %c0_8, %c0_9], %14 {strides = array<i32>} : memref<1x512x128xbf16, #tpu.memory_space<vmem>>, vector<1x512x128xbf16>,
    return
  }
  func.func @transform_0(%arg0: i32, %arg1: i32) -> (i32, i32, i32) {
    %c0_i32 = arith.constant 0 : i32
    %c0_i32_0 = arith.constant 0 : i32
    return %arg0, %arg1, %c0_i32 : i32, i32, i32
  }
  func.func @transform_1(%arg0: i32, %arg1: i32) -> (i32, i32) {
    %c0_i32 = arith.constant 0 : i32
    %c0_i32_0 = arith.constant 0 : i32
    %c0_i32_1 = arith.constant 0 : i32
    return %c0_i32, %c0_i32_0 : i32, i32
  }
  func.func @transform_2(%arg0: i32, %arg1: i32) -> (i32, i32, i32) {
    %c0_i32 = arith.constant 0 : i32
    %c0_i32_0 = arith.constant 0 : i32
    return %arg0, %arg1, %c0_i32 : i32, i32, i32
  }
  func.func @transform_3(%arg0: i32, %arg1: i32) -> (i32, i32, i32) {
    %c0_i32 = arith.constant 0 : i32
    %c0_i32_0 = arith.constant 0 : i32
    return %arg0, %arg1, %c0_i32 : i32, i32, i32
  }
}

</mosaic_0001>

<llo_original>
// kernel: tpu_custom_call.1
$region0: #{tpu_custom_call.1}
  #allocation0 [shape = 'u32[]', space=smem, size = 0x4, offset = 0x4, fixed_abs, tag = 'smem constant byte address 0x4 - core index']
  #allocation1 [shape = 'u32[144,128]{1,0:T(1,128)}', space=vmem, size = 0x12000, scoped, tag = 'internal scratch']
  %s0 = inlined_call_operand.hbm [shape: f32[2,1024,128], index: 0, kind: input, shape index: {}]
  %s1 = inlined_call_operand.hbm [shape: bf16[128,256], index: 1, kind: input, shape index: {}]
  %s2 = inlined_call_operand.hbm [shape: bf16[2,1024,128], index: 2, kind: output, shape index: {0}]
  %s3 = inlined_call_operand.hbm [shape: bf16[2,1024,128], index: 3, kind: output, shape index: {1}]
  %4 = xla_tuple %s2, %s3
  %s5 = sld [smem:[#allocation0]]
  $region57: #{tpu_custom_call.1} parent=0
    _
  %s7 = ssub.s32 1, %s5
  %s8 = scalar_select 0, %s7, %s5
  $region1: #{tpu_custom_call.1} parent=0
    #allocation2 [shape = 'u8[524288]{0}', space=vmem, size = 0x80000, scoped, tag = 'input window, operand 0']
    #allocation3 [shape = 's32[2]{0}', space=sflag, size = 0x8, scoped, tag = 'scoped memory for tpu_custom_call.1']
    #allocation4 [shape = 's32[2]{0}', space=sflag, size = 0x8, scoped, tag = 'scoped memory for tpu_custom_call.1']
    #allocation5 [shape = 'u8[65536]{0}', space=vmem, size = 0x10000, scoped, tag = 'input window, operand 1, single buffered']
    #allocation6 [shape = 's32[1]{0}', space=sflag, size = 0x4, scoped, tag = 'scoped memory for tpu_custom_call.1']
    #allocation7 [shape = 'u8[262144]{0}', space=vmem, size = 0x40000, scoped, tag = 'output window, operand 0']
    #allocation8 [shape = 'u8[262144]{0}', space=vmem, size = 0x40000, scoped, tag = 'output window, operand 1']
    #allocation9 [shape = 's32[2]{0}', space=sflag, size = 0x8, scoped, tag = 'scoped memory for tpu_custom_call.1']
    %9 = vsyncpa [#allocation3], 0
    %s10 = scalar_lea.sflag [#allocation3], 1
    %11 = vsyncpa %s10, 0
    %12 = vsyncpa [#allocation6], 0
    %13 = vsyncpa [#allocation4], 0
    %s14 = scalar_lea.sflag [#allocation4], 1
    %15 = vsyncpa %s14, 0
    %16 = vsyncpa [#allocation9], 0
    %s17 = scalar_lea.sflag [#allocation9], 1
    %18 = vsyncpa %s17, 0
    loop: start=0, step=1, limit=6
    $region2: #{tpu_custom_call.1} parent=1 // loop_pre_header
      _
    $region3: #{tpu_custom_call.1} parent=1 // loop_header
      %s20 = sphi 0, %s24
      %p21 = scmp.ge.s32.totalorder %s20, 6
      %s27 = sphi 0, %s39
      %s28 = sphi 0, %s35
      %s29 = sphi 0, %s27
      %s30 = sphi 0, %s28
      %s31 = sphi 0, %s29
      %s32 = sphi 0, %s30
      %s44 = sphi 0, %s46
      %s47 = sphi 0, %s44
      %s48 = sphi 0, %s47
      %s64 = sphi 0, %s48
      %s68 = sphi 0, %s68
      %s70 = sphi 0, %s68
      %s71 = sphi 0, %s70
      %s85 = sphi 0, %s71
      %s93 = sphi 0, %s95
      %s96 = sphi 0, %s93
      %s97 = sphi 0, %s96
      %s113 = sphi 0, %s97
      %s121 = sphi 0, %s123
      %s124 = sphi 0, %s121
      %s125 = sphi 0, %s124
      %s141 = sphi 0, %s125
    $region4: #{tpu_custom_call.1} parent=1 // loop_header_branch
      %23 = sbr.rel (%p21) target = $region8
    $region5: #{tpu_custom_call.1} parent=1 // loop_body
      %s25 = ssub.s32 %s20, 1
      %s26 = ssub.s32 %s20, 2
      %s33 = sadd.s32 1, %s28
      %p34 = scmp.ge.s32.totalorder %s33, 2
      %s35 = scalar_select %p34, 0, %s33
      %s36 = sadd.s32 1, %s27
      %s37 = scalar_select %p34, %s36, %s27
      %p38 = scmp.ge.s32.totalorder %s37, 2
      %s39 = scalar_select %p38, 0, %s37
      %s40 = ssub.s32 %s27, %s39
      %s41 = ssub.s32 %s28, %s35
      %s42 = sor.u32 %s40, %s41
      %p43 = scmp.eq.s32.totalorder %s42, 0
      %s45 = sadd.s32 %s44, 1
      %s46 = scalar_select %p43, %s44, %s45
      %p49 = pneg %p43
      %p50 = scmp.eq.s32.totalorder %s20, 3
      %p51 = por %p49, %p50
      %p52 = scmp.ne.s32.totalorder %s44, %s47
      %p53 = scmp.eq.s32.totalorder %s20, 0
      %p54 = por %p52, %p53
      %p55 = scmp.ne.s32.totalorder %s44, %s47
      %p56 = scmp.eq.s32.totalorder %s25, 3
      %p57 = por %p55, %p56
      %p58 = scmp.ne.s32.totalorder %s47, %s48
      %p59 = scmp.eq.s32.totalorder %s25, 0
      %p60 = por %p58, %p59
      %p61 = scmp.ne.s32.totalorder %s47, %s48
      %p62 = scmp.eq.s32.totalorder %s26, 3
      %p63 = por %p61, %p62
      %p65 = scmp.ne.s32.totalorder %s48, %s64
      %p66 = scmp.eq.s32.totalorder %s26, 0
      %p67 = por %p65, %p66
      %s69 = sadd.s32 %s68, 1
      %p72 = scmp.eq.s32.totalorder %s20, 3
      %p73 = scmp.ne.s32.totalorder %s68, %s70
      %p74 = scmp.eq.s32.totalorder %s20, 0
      %p75 = por %p73, %p74
      %p76 = scmp.ne.s32.totalorder %s68, %s70
      %p77 = scmp.eq.s32.totalorder %s25, 3
      %p78 = por %p76, %p77
      %p79 = scmp.ne.s32.totalorder %s70, %s71
      %p80 = scmp.eq.s32.totalorder %s25, 0
      %p81 = por %p79, %p80
      %p82 = scmp.ne.s32.totalorder %s70, %s71
      %p83 = scmp.eq.s32.totalorder %s26, 3
      %p84 = por %p82, %p83
      %p86 = scmp.ne.s32.totalorder %s71, %s85
      %p87 = scmp.eq.s32.totalorder %s26, 0
      %p88 = por %p86, %p87
      %s89 = ssub.s32 %s27, %s39
      %s90 = ssub.s32 %s28, %s35
      %s91 = sor.u32 %s89, %s90
      %p92 = scmp.eq.s32.totalorder %s91, 0
      %s94 = sadd.s32 %s93, 1
      %s95 = scalar_select %p92, %s93, %s94
      %p98 = pneg %p92
      %p99 = scmp.eq.s32.totalorder %s20, 3
      %p100 = por %p98, %p99
      %p101 = scmp.ne.s32.totalorder %s93, %s96
      %p102 = scmp.eq.s32.totalorder %s20, 0
      %p103 = por %p101, %p102
      %p104 = scmp.ne.s32.totalorder %s93, %s96
      %p105 = scmp.eq.s32.totalorder %s25, 3
      %p106 = por %p104, %p105
      %p107 = scmp.ne.s32.totalorder %s96, %s97
      %p108 = scmp.eq.s32.totalorder %s25, 0
      %p109 = por %p107, %p108
      %p110 = scmp.ne.s32.totalorder %s96, %s97
      %p111 = scmp.eq.s32.totalorder %s26, 3
      %p112 = por %p110, %p111
      %p114 = scmp.ne.s32.totalorder %s97, %s113
      %p115 = scmp.eq.s32.totalorder %s26, 0
      %p116 = por %p114, %p115
      %s117 = ssub.s32 %s27, %s39
      %s118 = ssub.s32 %s28, %s35
      %s119 = sor.u32 %s117, %s118
      %p120 = scmp.eq.s32.totalorder %s119, 0
      %s122 = sadd.s32 %s121, 1
      %s123 = scalar_select %p120, %s121, %s122
      %p126 = pneg %p120
      %p127 = scmp.eq.s32.totalorder %s20, 3
      %p128 = por %p126, %p127
      %p129 = scmp.ne.s32.totalorder %s121, %s124
      %p130 = scmp.eq.s32.totalorder %s20, 0
      %p131 = por %p129, %p130
      %p132 = scmp.ne.s32.totalorder %s121, %s124
      %p133 = scmp.eq.s32.totalorder %s25, 3
      %p134 = por %p132, %p133
      %p135 = scmp.ne.s32.totalorder %s124, %s125
      %p136 = scmp.eq.s32.totalorder %s25, 0
      %p137 = por %p135, %p136
      %p138 = scmp.ne.s32.totalorder %s124, %s125
      %p139 = scmp.eq.s32.totalorder %s26, 3
      %p140 = por %p138, %p139
      %p142 = scmp.ne.s32.totalorder %s125, %s141
      %p143 = scmp.eq.s32.totalorder %s26, 0
      %p144 = por %p142, %p143
      %p145 = scmp.le.s32.totalorder 1, %s20
      %p146 = scmp.lt.s32.totalorder %s20, 5
      %p147 = pnand %p145, %p146
      %p148 = pneg %p147
      // Predicated region
      $region9: #{tpu_custom_call.1} parent=5 // pred_check
        _
      $region10: #{tpu_custom_call.1} parent=5 // pred_check_branch
        %150 = sbr.rel (%p147) target = $region12
      $region11: #{tpu_custom_call.1} parent=5 // pred_region
        %s151 = ssub.s32 %s20, 1
        // Predicated region
        $region13: #{tpu_custom_call.1} parent=11 // pred_check
          %p152 = pneg %p81
        $region14: #{tpu_custom_call.1} parent=11 // pred_check_branch
          %154 = sbr.rel (%p152) target = $region16
        $region15: #{tpu_custom_call.1} parent=11 // pred_region
          %s156 = ssub.s32 2048, 2048
          %157 = vsyncadd [#allocation6], %s156
          %s158 = sshll.u32 [#allocation5], 4
          %s159 = int_to_ptr.vmem [resolvable:$true] %s158
          %164 = dma.hbm_to_vmem [thread:$0]  %s1, 2048, %s159, [#allocation6], 128, 128, 8
        $region16: #{tpu_custom_call.1} parent=11 // pred_fallthru
          _
      $region12: #{tpu_custom_call.1} parent=5 // pred_fallthru
        _
      %p165 = scmp.lt.s32.totalorder %s20, 4
      // Predicated region
      $region17: #{tpu_custom_call.1} parent=5 // pred_check
        %p166 = pneg %p165
      $region18: #{tpu_custom_call.1} parent=5 // pred_check_branch
        %168 = sbr.rel (%p166) target = $region20
      $region19: #{tpu_custom_call.1} parent=5 // pred_region
        // Predicated region
        $region21: #{tpu_custom_call.1} parent=19 // pred_check
          %p169 = pneg %p54
        $region22: #{tpu_custom_call.1} parent=19 // pred_check_branch
          %171 = sbr.rel (%p169) target = $region24
        $region23: #{tpu_custom_call.1} parent=19 // pred_region
          %s172 = sand.u32 %s44, 1
          %s173 = scalar_lea.sflag [#allocation3], %s172
          %s174 = sand.u32 %s44, 1
          %s175 = smul.addr %s174, 512
          %s176 = scalar_lea.vmem [#allocation2], %s175
          %s177 = smul.u32 64, %s28
          %s179 = ssub.s32 8192, 8192
          %180 = vsyncadd %s173, %s179
          %s181 = smul.addr %s27, 128
          %s182 = sadd.s32 %s177, %s181
          %s183 = smul.addr %s182, 128
          %s184 = scalar_lea.hbm %s0, %s183
          %s185 = sshll.u32 %s176, 4
          %s186 = int_to_ptr.vmem [resolvable:$true] %s185
          %191 = dma.hbm_to_vmem [thread:$0]  %s184, 8192, %s186, %s173, 128, 128, 8
        $region24: #{tpu_custom_call.1} parent=19 // pred_fallthru
          _
      $region20: #{tpu_custom_call.1} parent=5 // pred_fallthru
        _
      %p192 = scmp.le.s32.totalorder 1, %s20
      %p193 = scmp.lt.s32.totalorder %s20, 5
      %p194 = pnand %p192, %p193
      %p195 = pneg %p194
      // Predicated region
      $region25: #{tpu_custom_call.1} parent=5 // pred_check
        _
      $region26: #{tpu_custom_call.1} parent=5 // pred_check_branch
        %197 = sbr.rel (%p194) target = $region28
      $region27: #{tpu_custom_call.1} parent=5 // pred_region
        %s198 = ssub.s32 %s20, 1
        %s199 = sand.u32 %s47, 1
        %s200 = scalar_lea.sflag [#allocation3], %s199
        %s201 = sand.u32 %s47, 1
        %s202 = smul.addr %s201, 512
        %s203 = scalar_lea.vmem [#allocation2], %s202
        // Predicated region
        $region29: #{tpu_custom_call.1} parent=27 // pred_check
          %p204 = pneg %p60
        $region30: #{tpu_custom_call.1} parent=27 // pred_check_branch
          %206 = sbr.rel (%p204) target = $region32
        $region31: #{tpu_custom_call.1} parent=27 // pred_region
          %207 = dma.done %s200, 8192
        $region32: #{tpu_custom_call.1} parent=27 // pred_fallthru
          _
        // Predicated region
        $region33: #{tpu_custom_call.1} parent=27 // pred_check
          %p208 = pneg %p81
        $region34: #{tpu_custom_call.1} parent=27 // pred_check_branch
          %210 = sbr.rel (%p208) target = $region36
        $region35: #{tpu_custom_call.1} parent=27 // pred_region
          %211 = dma.done [#allocation6], 2048
        $region36: #{tpu_custom_call.1} parent=27 // pred_fallthru
          _
        %s212 = sand.u32 %s47, 1
        %s213 = scalar_lea.sflag [#allocation3], %s212
        %s214 = sand.u32 %s47, 1
        %s215 = smul.addr %s214, 512
        %s216 = scalar_lea.vmem [#allocation2], %s215
        %p217 = pneg %p60
        %p218 = pneg %p57
        %p219 = pneg %p81
        %p220 = pneg %p78
        %p221 = pneg %p109
        %p222 = pneg %p106
        %s223 = sand.u32 %s96, 1
        %s224 = scalar_lea.sflag [#allocation4], %s223
        %s225 = sand.u32 %s96, 1
        %s226 = smul.addr %s225, 256
        %s227 = scalar_lea.vmem [#allocation7], %s226
        %p228 = pneg %p137
        %p229 = pneg %p134
        %s230 = sand.u32 %s124, 1
        %s231 = scalar_lea.sflag [#allocation9], %s230
        %s232 = sand.u32 %s124, 1
        %s233 = smul.addr %s232, 256
        %s234 = scalar_lea.vmem [#allocation8], %s233
        %s235 = smul.u32 64, %s30
        %s236 = smul.u32 64, %s30
        %s237 = smul.u32 64, %s30
        %v239 = vld [vmem:[%s203] sm:$0xff]
        %v240 = vld [vmem:[%s203 + $0x8] sm:$0xff]
        %v241 = vld [vmem:[%s203 + $0x10] sm:$0xff]
        %v242 = vld [vmem:[%s203 + $0x18] sm:$0xff]
        %v243 = vld [vmem:[%s203 + $0x20] sm:$0xff]
        %v244 = vld [vmem:[%s203 + $0x28] sm:$0xff]
        %v245 = vld [vmem:[%s203 + $0x30] sm:$0xff]
        %v246 = vld [vmem:[%s203 + $0x38] sm:$0xff]
        %v247 = vld [vmem:[%s203 + $0x40] sm:$0xff]
        %v248 = vld [vmem:[%s203 + $0x48] sm:$0xff]
        %v249 = vld [vmem:[%s203 + $0x50] sm:$0xff]
        %v250 = vld [vmem:[%s203 + $0x58] sm:$0xff]
        %v251 = vld [vmem:[%s203 + $0x60] sm:$0xff]
        %v252 = vld [vmem:[%s203 + $0x68] sm:$0xff]
        %v253 = vld [vmem:[%s203 + $0x70] sm:$0xff]
        %v254 = vld [vmem:[%s203 + $0x78] sm:$0xff]
        %v255 = vld [vmem:[%s203 + $0x80] sm:$0xff]
        %v256 = vld [vmem:[%s203 + $0x88] sm:$0xff]
        %v257 = vld [vmem:[%s203 + $0x90] sm:$0xff]
        %v258 = vld [vmem:[%s203 + $0x98] sm:$0xff]
        %v259 = vld [vmem:[%s203 + $0xa0] sm:$0xff]
        %v260 = vld [vmem:[%s203 + $0xa8] sm:$0xff]
        %v261 = vld [vmem:[%s203 + $0xb0] sm:$0xff]
        %v262 = vld [vmem:[%s203 + $0xb8] sm:$0xff]
        %v263 = vld [vmem:[%s203 + $0xc0] sm:$0xff]
        %v264 = vld [vmem:[%s203 + $0xc8] sm:$0xff]
        %v265 = vld [vmem:[%s203 + $0xd0] sm:$0xff]
        %v266 = vld [vmem:[%s203 + $0xd8] sm:$0xff]
        %v267 = vld [vmem:[%s203 + $0xe0] sm:$0xff]
        %v268 = vld [vmem:[%s203 + $0xe8] sm:$0xff]
        %v269 = vld [vmem:[%s203 + $0xf0] sm:$0xff]
        %v270 = vld [vmem:[%s203 + $0xf8] sm:$0xff]
        %v271 = vld [vmem:[%s203 + $0x100] sm:$0xff]
        %v272 = vld [vmem:[%s203 + $0x108] sm:$0xff]
        %v273 = vld [vmem:[%s203 + $0x110] sm:$0xff]
        %v274 = vld [vmem:[%s203 + $0x118] sm:$0xff]
        %v275 = vld [vmem:[%s203 + $0x120] sm:$0xff]
        %v276 = vld [vmem:[%s203 + $0x128] sm:$0xff]
        %v277 = vld [vmem:[%s203 + $0x130] sm:$0xff]
        %v278 = vld [vmem:[%s203 + $0x138] sm:$0xff]
        %v279 = vld [vmem:[%s203 + $0x140] sm:$0xff]
        %v280 = vld [vmem:[%s203 + $0x148] sm:$0xff]
        %v281 = vld [vmem:[%s203 + $0x150] sm:$0xff]
        %v282 = vld [vmem:[%s203 + $0x158] sm:$0xff]
        %v283 = vld [vmem:[%s203 + $0x160] sm:$0xff]
        %v284 = vld [vmem:[%s203 + $0x168] sm:$0xff]
        %v285 = vld [vmem:[%s203 + $0x170] sm:$0xff]
        %v286 = vld [vmem:[%s203 + $0x178] sm:$0xff]
        %v287 = vld [vmem:[%s203 + $0x180] sm:$0xff]
        %v288 = vld [vmem:[%s203 + $0x188] sm:$0xff]
        %v289 = vld [vmem:[%s203 + $0x190] sm:$0xff]
        %v290 = vld [vmem:[%s203 + $0x198] sm:$0xff]
        %v291 = vld [vmem:[%s203 + $0x1a0] sm:$0xff]
        %v292 = vld [vmem:[%s203 + $0x1a8] sm:$0xff]
        %v293 = vld [vmem:[%s203 + $0x1b0] sm:$0xff]
        %v294 = vld [vmem:[%s203 + $0x1b8] sm:$0xff]
        %v295 = vld [vmem:[%s203 + $0x1c0] sm:$0xff]
        %v296 = vld [vmem:[%s203 + $0x1c8] sm:$0xff]
        %v297 = vld [vmem:[%s203 + $0x1d0] sm:$0xff]
        %v298 = vld [vmem:[%s203 + $0x1d8] sm:$0xff]
        %v299 = vld [vmem:[%s203 + $0x1e0] sm:$0xff]
        %v300 = vld [vmem:[%s203 + $0x1e8] sm:$0xff]
        %v301 = vld [vmem:[%s203 + $0x1f0] sm:$0xff]
        %v302 = vld [vmem:[%s203 + $0x1f8] sm:$0xff]
        %v303 = vpack.c.bf16 %v240, %v239
        %v304 = vpack.c.bf16 %v242, %v241
        %v305 = vpack.c.bf16 %v244, %v243
        %v306 = vpack.c.bf16 %v246, %v245
        %v307 = vpack.c.bf16 %v248, %v247
        %v308 = vpack.c.bf16 %v250, %v249
        %v309 = vpack.c.bf16 %v252, %v251
        %v310 = vpack.c.bf16 %v254, %v253
        %v311 = vpack.c.bf16 %v256, %v255
        %v312 = vpack.c.bf16 %v258, %v257
        %v313 = vpack.c.bf16 %v260, %v259
        %v314 = vpack.c.bf16 %v262, %v261
        %v315 = vpack.c.bf16 %v264, %v263
        %v316 = vpack.c.bf16 %v266, %v265
        %v317 = vpack.c.bf16 %v268, %v267
        %v318 = vpack.c.bf16 %v270, %v269
        %v319 = vpack.c.bf16 %v272, %v271
        %v320 = vpack.c.bf16 %v274, %v273
        %v321 = vpack.c.bf16 %v276, %v275
        %v322 = vpack.c.bf16 %v278, %v277
        %v323 = vpack.c.bf16 %v280, %v279
        %v324 = vpack.c.bf16 %v282, %v281
        %v325 = vpack.c.bf16 %v284, %v283
        %v326 = vpack.c.bf16 %v286, %v285
        %v327 = vpack.c.bf16 %v288, %v287
        %v328 = vpack.c.bf16 %v290, %v289
        %v329 = vpack.c.bf16 %v292, %v291
        %v330 = vpack.c.bf16 %v294, %v293
        %v331 = vpack.c.bf16 %v296, %v295
        %v332 = vpack.c.bf16 %v298, %v297
        %v333 = vpack.c.bf16 %v300, %v299
        %v334 = vpack.c.bf16 %v302, %v301
        %v335 = vld [vmem:[#allocation5] sm:$0xff]
        %v336 = vld [vmem:[#allocation5 + $0x8] sm:$0xff]
        %v337 = vld [vmem:[#allocation5 + $0x10] sm:$0xff]
        %v338 = vld [vmem:[#allocation5 + $0x18] sm:$0xff]
        %v339 = vld [vmem:[#allocation5 + $0x20] sm:$0xff]
        %v340 = vld [vmem:[#allocation5 + $0x28] sm:$0xff]
        %v341 = vld [vmem:[#allocation5 + $0x30] sm:$0xff]
        %v342 = vld [vmem:[#allocation5 + $0x38] sm:$0xff]
        %v343 = vld [vmem:[#allocation5 + $0x40] sm:$0xff]
        %v344 = vld [vmem:[#allocation5 + $0x48] sm:$0xff]
        %v345 = vld [vmem:[#allocation5 + $0x50] sm:$0xff]
        %v346 = vld [vmem:[#allocation5 + $0x58] sm:$0xff]
        %v347 = vld [vmem:[#allocation5 + $0x60] sm:$0xff]
        %v348 = vld [vmem:[#allocation5 + $0x68] sm:$0xff]
        %v349 = vld [vmem:[#allocation5 + $0x70] sm:$0xff]
        %v350 = vld [vmem:[#allocation5 + $0x78] sm:$0xff]
        %v367 = vunpack.c.l.b16 %v335
        %v368 = vunpack.c.h.b16 %v335
        %v369 = vunpack.c.l.b16 %v336
        %v370 = vunpack.c.h.b16 %v336
        %v371 = vunpack.c.l.b16 %v337
        %v372 = vunpack.c.h.b16 %v337
        %v373 = vunpack.c.l.b16 %v338
        %v374 = vunpack.c.h.b16 %v338
        %v375 = vunpack.c.l.b16 %v339
        %v376 = vunpack.c.h.b16 %v339
        %v377 = vunpack.c.l.b16 %v340
        %v378 = vunpack.c.h.b16 %v340
        %v379 = vunpack.c.l.b16 %v341
        %v380 = vunpack.c.h.b16 %v341
        %v381 = vunpack.c.l.b16 %v342
        %v382 = vunpack.c.h.b16 %v342
        %v383 = vunpack.c.l.b16 %v343
        %v384 = vunpack.c.h.b16 %v343
        %v385 = vunpack.c.l.b16 %v344
        %v386 = vunpack.c.h.b16 %v344
        %v387 = vunpack.c.l.b16 %v345
        %v388 = vunpack.c.h.b16 %v345
        %v389 = vunpack.c.l.b16 %v346
        %v390 = vunpack.c.h.b16 %v346
        %v391 = vunpack.c.l.b16 %v347
        %v392 = vunpack.c.h.b16 %v347
        %v393 = vunpack.c.l.b16 %v348
        %v394 = vunpack.c.h.b16 %v348
        %v395 = vunpack.c.l.b16 %v349
        %v396 = vunpack.c.h.b16 %v349
        %v397 = vunpack.c.l.b16 %v350
        %v398 = vunpack.c.h.b16 %v350
        %v399 = vpack.c.b16 %v369, %v367
        %v400 = vpack.c.b16 %v370, %v368
        %v401 = vpack.c.b16 %v373, %v371
        %v402 = vpack.c.b16 %v374, %v372
        %v403 = vpack.c.b16 %v377, %v375
        %v404 = vpack.c.b16 %v378, %v376
        %v405 = vpack.c.b16 %v381, %v379
        %v406 = vpack.c.b16 %v382, %v380
        %v407 = vpack.c.b16 %v385, %v383
        %v408 = vpack.c.b16 %v386, %v384
        %v409 = vpack.c.b16 %v389, %v387
        %v410 = vpack.c.b16 %v390, %v388
        %v411 = vpack.c.b16 %v393, %v391
        %v412 = vpack.c.b16 %v394, %v392
        %v413 = vpack.c.b16 %v397, %v395
        %v414 = vpack.c.b16 %v398, %v396
        %431 = vmatprep.subr.bf16.mxu0 %v414
        %432 = vmatpush1.bf16.msra.mxu0 %v413
        %433 = vmatprep.subr.bf16.mxu0 %v412
        %434 = vmatpush1.bf16.msra.mxu0 %v411
        %435 = vmatprep.subr.bf16.mxu0 %v410
        %436 = vmatpush1.bf16.msra.mxu0 %v409
        %437 = vmatprep.subr.bf16.mxu0 %v408
        %438 = vmatpush1.bf16.msra.mxu0 %v407
        %439 = vmatprep.subr.bf16.mxu0 %v406
        %440 = vmatpush1.bf16.msra.mxu0 %v405
        %441 = vmatprep.subr.bf16.mxu0 %v404
        %442 = vmatpush1.bf16.msra.mxu0 %v403
        %443 = vmatprep.subr.bf16.mxu0 %v402
        %444 = vmatpush1.bf16.msra.mxu0 %v401
        %445 = vmatprep.subr.bf16.mxu0 %v400
        %446 = vmatpush1.bf16.msra.mxu0 %v399
        %447 = vmatprep.subr.bf16.mxu0 0
        %448 = vmatpush2.bf16.msra.mxu0 0
        %449 = vmatprep.subr.bf16.mxu0 0
        %450 = vmatpush2.bf16.msra.mxu0 0
        %451 = vmatprep.subr.bf16.mxu0 0
        %452 = vmatpush2.bf16.msra.mxu0 0
        %453 = vmatprep.subr.bf16.mxu0 0
        %454 = vmatpush2.bf16.msra.mxu0 0
        %455 = vmatprep.subr.bf16.mxu0 0
        %456 = vmatpush2.bf16.msra.mxu0 0
        %457 = vmatprep.subr.bf16.mxu0 0
        %458 = vmatpush2.bf16.msra.mxu0 0
        %459 = vmatprep.subr.bf16.mxu0 0
        %460 = vmatpush2.bf16.msra.mxu0 0
        %461 = vmatprep.subr.bf16.mxu0 0
        %462 = vmatpush2.bf16.msra.mxu0 0
        %463 = vmatprep.mubr.bf16.mxu0 0
        %464 = vmatmul.mubr.bf16.gmra.mxu0 %v303
        %v465 = vpop.f32.mrf.mxu0
        %v466 = vadd.f32 0.0, %v465
        %v467 = vpop.f32.mrf.mxu0
        %v468 = vadd.f32 0.0, %v467
        %v469 = vpop.f32.mrf.mxu0
        %v470 = vadd.f32 0.0, %v469
        %v471 = vpop.f32.mrf.mxu0
        %v472 = vadd.f32 0.0, %v471
        %473 = vmatprep.mubr.bf16.mxu0 0
        %474 = vmatmul.mubr.bf16.gmra.mxu0 %v304
        %v475 = vpop.f32.mrf.mxu0
        %v476 = vadd.f32 0.0, %v475
        %v477 = vpop.f32.mrf.mxu0
        %v478 = vadd.f32 0.0, %v477
        %v479 = vpop.f32.mrf.mxu0
        %v480 = vadd.f32 0.0, %v479
        %v481 = vpop.f32.mrf.mxu0
        %v482 = vadd.f32 0.0, %v481
        %483 = vmatprep.mubr.bf16.mxu0 0
        %484 = vmatmul.mubr.bf16.gmra.mxu0 %v305
        %v485 = vpop.f32.mrf.mxu0
        %v486 = vadd.f32 0.0, %v485
        %v487 = vpop.f32.mrf.mxu0
        %v488 = vadd.f32 0.0, %v487
        %v489 = vpop.f32.mrf.mxu0
        %v490 = vadd.f32 0.0, %v489
        %v491 = vpop.f32.mrf.mxu0
        %v492 = vadd.f32 0.0, %v491
        %493 = vmatprep.mubr.bf16.mxu0 0
        %494 = vmatmul.mubr.bf16.gmra.mxu0 %v306
        %v495 = vpop.f32.mrf.mxu0
        %v496 = vadd.f32 0.0, %v495
        %v497 = vpop.f32.mrf.mxu0
        %v498 = vadd.f32 0.0, %v497
        %v499 = vpop.f32.mrf.mxu0
        %v500 = vadd.f32 0.0, %v499
        %v501 = vpop.f32.mrf.mxu0
        %v502 = vadd.f32 0.0, %v501
        %503 = vmatprep.mubr.bf16.mxu0 0
        %504 = vmatmul.mubr.bf16.gmra.mxu0 %v307
        %v505 = vpop.f32.mrf.mxu0
        %v506 = vadd.f32 0.0, %v505
        %v507 = vpop.f32.mrf.mxu0
        %v508 = vadd.f32 0.0, %v507
        %v509 = vpop.f32.mrf.mxu0
        %v510 = vadd.f32 0.0, %v509
        %v511 = vpop.f32.mrf.mxu0
        %v512 = vadd.f32 0.0, %v511
        %513 = vmatprep.mubr.bf16.mxu0 0
        %514 = vmatmul.mubr.bf16.gmra.mxu0 %v308
        %v515 = vpop.f32.mrf.mxu0
        %v516 = vadd.f32 0.0, %v515
        %v517 = vpop.f32.mrf.mxu0
        %v518 = vadd.f32 0.0, %v517
        %v519 = vpop.f32.mrf.mxu0
        %v520 = vadd.f32 0.0, %v519
        %v521 = vpop.f32.mrf.mxu0
        %v522 = vadd.f32 0.0, %v521
        %523 = vmatprep.mubr.bf16.mxu0 0
        %524 = vmatmul.mubr.bf16.gmra.mxu0 %v309
        %v525 = vpop.f32.mrf.mxu0
        %v526 = vadd.f32 0.0, %v525
        %v527 = vpop.f32.mrf.mxu0
        %v528 = vadd.f32 0.0, %v527
        %v529 = vpop.f32.mrf.mxu0
        %v530 = vadd.f32 0.0, %v529
        %v531 = vpop.f32.mrf.mxu0
        %v532 = vadd.f32 0.0, %v531
        %533 = vmatprep.mubr.bf16.mxu0 0
        %534 = vmatmul.mubr.bf16.gmra.mxu0 %v310
        %v535 = vpop.f32.mrf.mxu0
        %v536 = vadd.f32 0.0, %v535
        %v537 = vpop.f32.mrf.mxu0
        %v538 = vadd.f32 0.0, %v537
        %v539 = vpop.f32.mrf.mxu0
        %v540 = vadd.f32 0.0, %v539
        %v541 = vpop.f32.mrf.mxu0
        %v542 = vadd.f32 0.0, %v541
        %543 = vmatprep.mubr.bf16.mxu0 0
        %544 = vmatmul.mubr.bf16.gmra.mxu0 %v311
        %v545 = vpop.f32.mrf.mxu0
        %v546 = vadd.f32 0.0, %v545
        %v547 = vpop.f32.mrf.mxu0
        %v548 = vadd.f32 0.0, %v547
        %v549 = vpop.f32.mrf.mxu0
        %v550 = vadd.f32 0.0, %v549
        %v551 = vpop.f32.mrf.mxu0
        %v552 = vadd.f32 0.0, %v551
        %553 = vmatprep.mubr.bf16.mxu0 0
        %554 = vmatmul.mubr.bf16.gmra.mxu0 %v312
        %v555 = vpop.f32.mrf.mxu0
        %v556 = vadd.f32 0.0, %v555
        %v557 = vpop.f32.mrf.mxu0
        %v558 = vadd.f32 0.0, %v557
        %v559 = vpop.f32.mrf.mxu0
        %v560 = vadd.f32 0.0, %v559
        %v561 = vpop.f32.mrf.mxu0
        %v562 = vadd.f32 0.0, %v561
        %563 = vmatprep.mubr.bf16.mxu0 0
        %564 = vmatmul.mubr.bf16.gmra.mxu0 %v313
        %v565 = vpop.f32.mrf.mxu0
        %v566 = vadd.f32 0.0, %v565
        %v567 = vpop.f32.mrf.mxu0
        %v568 = vadd.f32 0.0, %v567
        %v569 = vpop.f32.mrf.mxu0
        %v570 = vadd.f32 0.0, %v569
        %v571 = vpop.f32.mrf.mxu0
        %v572 = vadd.f32 0.0, %v571
        %573 = vmatprep.mubr.bf16.mxu0 0
        %574 = vmatmul.mubr.bf16.gmra.mxu0 %v314
        %v575 = vpop.f32.mrf.mxu0
        %v576 = vadd.f32 0.0, %v575
        %v577 = vpop.f32.mrf.mxu0
        %v578 = vadd.f32 0.0, %v577
        %v579 = vpop.f32.mrf.mxu0
        %v580 = vadd.f32 0.0, %v579
        %v581 = vpop.f32.mrf.mxu0
        %v582 = vadd.f32 0.0, %v581
        %583 = vmatprep.mubr.bf16.mxu0 0
        %584 = vmatmul.mubr.bf16.gmra.mxu0 %v315
        %v585 = vpop.f32.mrf.mxu0
        %v586 = vadd.f32 0.0, %v585
        %v587 = vpop.f32.mrf.mxu0
        %v588 = vadd.f32 0.0, %v587
        %v589 = vpop.f32.mrf.mxu0
        %v590 = vadd.f32 0.0, %v589
        %v591 = vpop.f32.mrf.mxu0
        %v592 = vadd.f32 0.0, %v591
        %593 = vmatprep.mubr.bf16.mxu0 0
        %594 = vmatmul.mubr.bf16.gmra.mxu0 %v316
        %v595 = vpop.f32.mrf.mxu0
        %v596 = vadd.f32 0.0, %v595
        %v597 = vpop.f32.mrf.mxu0
        %v598 = vadd.f32 0.0, %v597
        %v599 = vpop.f32.mrf.mxu0
        %v600 = vadd.f32 0.0, %v599
        %v601 = vpop.f32.mrf.mxu0
        %v602 = vadd.f32 0.0, %v601
        %603 = vmatprep.mubr.bf16.mxu0 0
        %604 = vmatmul.mubr.bf16.gmra.mxu0 %v317
        %v605 = vpop.f32.mrf.mxu0
        %v606 = vadd.f32 0.0, %v605
        %v607 = vpop.f32.mrf.mxu0
        %v608 = vadd.f32 0.0, %v607
        %v609 = vpop.f32.mrf.mxu0
        %v610 = vadd.f32 0.0, %v609
        %v611 = vpop.f32.mrf.mxu0
        %v612 = vadd.f32 0.0, %v611
        %613 = vmatprep.mubr.bf16.mxu0 0
        %614 = vmatmul.mubr.bf16.gmra.mxu0 %v318
        %v615 = vpop.f32.mrf.mxu0
        %v616 = vadd.f32 0.0, %v615
        %v617 = vpop.f32.mrf.mxu0
        %v618 = vadd.f32 0.0, %v617
        %v619 = vpop.f32.mrf.mxu0
        %v620 = vadd.f32 0.0, %v619
        %v621 = vpop.f32.mrf.mxu0
        %v622 = vadd.f32 0.0, %v621
        %623 = vmatprep.mubr.bf16.mxu0 0
        %624 = vmatmul.mubr.bf16.gmra.mxu0 %v319
        %v625 = vpop.f32.mrf.mxu0
        %v626 = vadd.f32 0.0, %v625
        %v627 = vpop.f32.mrf.mxu0
        %v628 = vadd.f32 0.0, %v627
        %v629 = vpop.f32.mrf.mxu0
        %v630 = vadd.f32 0.0, %v629
        %v631 = vpop.f32.mrf.mxu0
        %v632 = vadd.f32 0.0, %v631
        %633 = vmatprep.mubr.bf16.mxu0 0
        %634 = vmatmul.mubr.bf16.gmra.mxu0 %v320
        %v635 = vpop.f32.mrf.mxu0
        %v636 = vadd.f32 0.0, %v635
        %v637 = vpop.f32.mrf.mxu0
        %v638 = vadd.f32 0.0, %v637
        %v639 = vpop.f32.mrf.mxu0
        %v640 = vadd.f32 0.0, %v639
        %v641 = vpop.f32.mrf.mxu0
        %v642 = vadd.f32 0.0, %v641
        %643 = vmatprep.mubr.bf16.mxu0 0
        %644 = vmatmul.mubr.bf16.gmra.mxu0 %v321
        %v645 = vpop.f32.mrf.mxu0
        %v646 = vadd.f32 0.0, %v645
        %v647 = vpop.f32.mrf.mxu0
        %v648 = vadd.f32 0.0, %v647
        %v649 = vpop.f32.mrf.mxu0
        %v650 = vadd.f32 0.0, %v649
        %v651 = vpop.f32.mrf.mxu0
        %v652 = vadd.f32 0.0, %v651
        %653 = vmatprep.mubr.bf16.mxu0 0
        %654 = vmatmul.mubr.bf16.gmra.mxu0 %v322
        %v655 = vpop.f32.mrf.mxu0
        %v656 = vadd.f32 0.0, %v655
        %v657 = vpop.f32.mrf.mxu0
        %v658 = vadd.f32 0.0, %v657
        %v659 = vpop.f32.mrf.mxu0
        %v660 = vadd.f32 0.0, %v659
        %v661 = vpop.f32.mrf.mxu0
        %v662 = vadd.f32 0.0, %v661
        %663 = vmatprep.mubr.bf16.mxu0 0
        %664 = vmatmul.mubr.bf16.gmra.mxu0 %v323
        %v665 = vpop.f32.mrf.mxu0
        %v666 = vadd.f32 0.0, %v665
        %v667 = vpop.f32.mrf.mxu0
        %v668 = vadd.f32 0.0, %v667
        %v669 = vpop.f32.mrf.mxu0
        %v670 = vadd.f32 0.0, %v669
        %v671 = vpop.f32.mrf.mxu0
        %v672 = vadd.f32 0.0, %v671
        %673 = vmatprep.mubr.bf16.mxu0 0
        %674 = vmatmul.mubr.bf16.gmra.mxu0 %v324
        %v675 = vpop.f32.mrf.mxu0
        %v676 = vadd.f32 0.0, %v675
        %v677 = vpop.f32.mrf.mxu0
        %v678 = vadd.f32 0.0, %v677
        %v679 = vpop.f32.mrf.mxu0
        %v680 = vadd.f32 0.0, %v679
        %v681 = vpop.f32.mrf.mxu0
        %v682 = vadd.f32 0.0, %v681
        %683 = vmatprep.mubr.bf16.mxu0 0
        %684 = vmatmul.mubr.bf16.gmra.mxu0 %v325
        %v685 = vpop.f32.mrf.mxu0
        %v686 = vadd.f32 0.0, %v685
        %v687 = vpop.f32.mrf.mxu0
        %v688 = vadd.f32 0.0, %v687
        %v689 = vpop.f32.mrf.mxu0
        %v690 = vadd.f32 0.0, %v689
        %v691 = vpop.f32.mrf.mxu0
        %v692 = vadd.f32 0.0, %v691
        %693 = vmatprep.mubr.bf16.mxu0 0
        %694 = vmatmul.mubr.bf16.gmra.mxu0 %v326
        %v695 = vpop.f32.mrf.mxu0
        %v696 = vadd.f32 0.0, %v695
        %v697 = vpop.f32.mrf.mxu0
        %v698 = vadd.f32 0.0, %v697
        %v699 = vpop.f32.mrf.mxu0
        %v700 = vadd.f32 0.0, %v699
        %v701 = vpop.f32.mrf.mxu0
        %v702 = vadd.f32 0.0, %v701
        %703 = vmatprep.mubr.bf16.mxu0 0
        %704 = vmatmul.mubr.bf16.gmra.mxu0 %v327
        %v705 = vpop.f32.mrf.mxu0
        %v706 = vadd.f32 0.0, %v705
        %v707 = vpop.f32.mrf.mxu0
        %v708 = vadd.f32 0.0, %v707
        %v709 = vpop.f32.mrf.mxu0
        %v710 = vadd.f32 0.0, %v709
        %v711 = vpop.f32.mrf.mxu0
        %v712 = vadd.f32 0.0, %v711
        %713 = vmatprep.mubr.bf16.mxu0 0
        %714 = vmatmul.mubr.bf16.gmra.mxu0 %v328
        %v715 = vpop.f32.mrf.mxu0
        %v716 = vadd.f32 0.0, %v715
        %v717 = vpop.f32.mrf.mxu0
        %v718 = vadd.f32 0.0, %v717
        %v719 = vpop.f32.mrf.mxu0
        %v720 = vadd.f32 0.0, %v719
        %v721 = vpop.f32.mrf.mxu0
        %v722 = vadd.f32 0.0, %v721
        %723 = vmatprep.mubr.bf16.mxu0 0
        %724 = vmatmul.mubr.bf16.gmra.mxu0 %v329
        %v725 = vpop.f32.mrf.mxu0
        %v726 = vadd.f32 0.0, %v725
        %v727 = vpop.f32.mrf.mxu0
        %v728 = vadd.f32 0.0, %v727
        %v729 = vpop.f32.mrf.mxu0
        %v730 = vadd.f32 0.0, %v729
        %v731 = vpop.f32.mrf.mxu0
        %v732 = vadd.f32 0.0, %v731
        %733 = vmatprep.mubr.bf16.mxu0 0
        %734 = vmatmul.mubr.bf16.gmra.mxu0 %v330
        %v735 = vpop.f32.mrf.mxu0
        %v736 = vadd.f32 0.0, %v735
        %v737 = vpop.f32.mrf.mxu0
        %v738 = vadd.f32 0.0, %v737
        %v739 = vpop.f32.mrf.mxu0
        %v740 = vadd.f32 0.0, %v739
        %v741 = vpop.f32.mrf.mxu0
        %v742 = vadd.f32 0.0, %v741
        %743 = vmatprep.mubr.bf16.mxu0 0
        %744 = vmatmul.mubr.bf16.gmra.mxu0 %v331
        %v745 = vpop.f32.mrf.mxu0
        %v746 = vadd.f32 0.0, %v745
        %v747 = vpop.f32.mrf.mxu0
        %v748 = vadd.f32 0.0, %v747
        %v749 = vpop.f32.mrf.mxu0
        %v750 = vadd.f32 0.0, %v749
        %v751 = vpop.f32.mrf.mxu0
        %v752 = vadd.f32 0.0, %v751
        %753 = vmatprep.mubr.bf16.mxu0 0
        %754 = vmatmul.mubr.bf16.gmra.mxu0 %v332
        %v755 = vpop.f32.mrf.mxu0
        %v756 = vadd.f32 0.0, %v755
        %v757 = vpop.f32.mrf.mxu0
        %v758 = vadd.f32 0.0, %v757
        %v759 = vpop.f32.mrf.mxu0
        %v760 = vadd.f32 0.0, %v759
        %v761 = vpop.f32.mrf.mxu0
        %v762 = vadd.f32 0.0, %v761
        %763 = vmatprep.mubr.bf16.mxu0 0
        %764 = vmatmul.mubr.bf16.gmra.mxu0 %v333
        %v765 = vpop.f32.mrf.mxu0
        %v766 = vadd.f32 0.0, %v765
        %v767 = vpop.f32.mrf.mxu0
        %v768 = vadd.f32 0.0, %v767
        %v769 = vpop.f32.mrf.mxu0
        %v770 = vadd.f32 0.0, %v769
        %v771 = vpop.f32.mrf.mxu0
        %v772 = vadd.f32 0.0, %v771
        %773 = vmatprep.mubr.bf16.mxu0 0
        %774 = vmatmul.mubr.bf16.gmra.mxu0 %v334
        %v775 = vpop.f32.mrf.mxu0
        %v776 = vadd.f32 0.0, %v775
        %v777 = vpop.f32.mrf.mxu0
        %v778 = vadd.f32 0.0, %v777
        %v779 = vpop.f32.mrf.mxu0
        %v780 = vadd.f32 0.0, %v779
        %v781 = vpop.f32.mrf.mxu0
        %v782 = vadd.f32 0.0, %v781
        %783 = vdwg.mxu0
        %v784 = vpack.c.bf16 %v470, %v466
        %v785 = vpack.c.bf16 %v480, %v476
        %v786 = vpack.c.bf16 %v490, %v486
        %v787 = vpack.c.bf16 %v500, %v496
        %v788 = vpack.c.bf16 %v510, %v506
        %v789 = vpack.c.bf16 %v520, %v516
        %v790 = vpack.c.bf16 %v530, %v526
        %v791 = vpack.c.bf16 %v540, %v536
        %v792 = vpack.c.bf16 %v550, %v546
        %v793 = vpack.c.bf16 %v560, %v556
        %v794 = vpack.c.bf16 %v570, %v566
        %v795 = vpack.c.bf16 %v580, %v576
        %v796 = vpack.c.bf16 %v590, %v586
        %v797 = vpack.c.bf16 %v600, %v596
        %v798 = vpack.c.bf16 %v610, %v606
        %v799 = vpack.c.bf16 %v620, %v616
        %v800 = vpack.c.bf16 %v630, %v626
        %v801 = vpack.c.bf16 %v640, %v636
        %v802 = vpack.c.bf16 %v650, %v646
        %v803 = vpack.c.bf16 %v660, %v656
        %v804 = vpack.c.bf16 %v670, %v666
        %v805 = vpack.c.bf16 %v680, %v676
        %v806 = vpack.c.bf16 %v690, %v686
        %v807 = vpack.c.bf16 %v700, %v696
        %v808 = vpack.c.bf16 %v710, %v706
        %v809 = vpack.c.bf16 %v720, %v716
        %v810 = vpack.c.bf16 %v730, %v726
        %v811 = vpack.c.bf16 %v740, %v736
        %v812 = vpack.c.bf16 %v750, %v746
        %v813 = vpack.c.bf16 %v760, %v756
        %v814 = vpack.c.bf16 %v770, %v766
        %v815 = vpack.c.bf16 %v780, %v776
        %v848 = vunpack.c.l.b16 %v784
        %v849 = vunpack.c.h.b16 %v784
        %v850 = vunpack.c.l.b16 %v785
        %v851 = vunpack.c.h.b16 %v785
        %v852 = vunpack.c.l.b16 %v786
        %v853 = vunpack.c.h.b16 %v786
        %v854 = vunpack.c.l.b16 %v787
        %v855 = vunpack.c.h.b16 %v787
        %v856 = vunpack.c.l.b16 %v788
        %v857 = vunpack.c.h.b16 %v788
        %v858 = vunpack.c.l.b16 %v789
        %v859 = vunpack.c.h.b16 %v789
        %v860 = vunpack.c.l.b16 %v790
        %v861 = vunpack.c.h.b16 %v790
        %v862 = vunpack.c.l.b16 %v791
        %v863 = vunpack.c.h.b16 %v791
        %v864 = vunpack.c.l.b16 %v792
        %v865 = vunpack.c.h.b16 %v792
        %v866 = vunpack.c.l.b16 %v793
        %v867 = vunpack.c.h.b16 %v793
        %v868 = vunpack.c.l.b16 %v794
        %v869 = vunpack.c.h.b16 %v794
        %v870 = vunpack.c.l.b16 %v795
        %v871 = vunpack.c.h.b16 %v795
        %v872 = vunpack.c.l.b16 %v796
        %v873 = vunpack.c.h.b16 %v796
        %v874 = vunpack.c.l.b16 %v797
        %v875 = vunpack.c.h.b16 %v797
        %v876 = vunpack.c.l.b16 %v798
        %v877 = vunpack.c.h.b16 %v798
        %v878 = vunpack.c.l.b16 %v799
        %v879 = vunpack.c.h.b16 %v799
        %v880 = vunpack.c.l.b16 %v800
        %v881 = vunpack.c.h.b16 %v800
        %v882 = vunpack.c.l.b16 %v801
        %v883 = vunpack.c.h.b16 %v801
        %v884 = vunpack.c.l.b16 %v802
        %v885 = vunpack.c.h.b16 %v802
        %v886 = vunpack.c.l.b16 %v803
        %v887 = vunpack.c.h.b16 %v803
        %v888 = vunpack.c.l.b16 %v804
        %v889 = vunpack.c.h.b16 %v804
        %v890 = vunpack.c.l.b16 %v805
        %v891 = vunpack.c.h.b16 %v805
        %v892 = vunpack.c.l.b16 %v806
        %v893 = vunpack.c.h.b16 %v806
        %v894 = vunpack.c.l.b16 %v807
        %v895 = vunpack.c.h.b16 %v807
        %v896 = vunpack.c.l.b16 %v808
        %v897 = vunpack.c.h.b16 %v808
        %v898 = vunpack.c.l.b16 %v809
        %v899 = vunpack.c.h.b16 %v809
        %v900 = vunpack.c.l.b16 %v810
        %v901 = vunpack.c.h.b16 %v810
        %v902 = vunpack.c.l.b16 %v811
        %v903 = vunpack.c.h.b16 %v811
        %v904 = vunpack.c.l.b16 %v812
        %v905 = vunpack.c.h.b16 %v812
        %v906 = vunpack.c.l.b16 %v813
        %v907 = vunpack.c.h.b16 %v813
        %v908 = vunpack.c.l.b16 %v814
        %v909 = vunpack.c.h.b16 %v814
        %v910 = vunpack.c.l.b16 %v815
        %v911 = vunpack.c.h.b16 %v815
        %v912 = vpack.c.b16 %v848, %v848
        %v913 = vpack.c.b16 %v849, %v849
        %v914 = vpack.c.b16 %v850, %v850
        %v915 = vpack.c.b16 %v851, %v851
        %v916 = vpack.c.b16 %v852, %v852
        %v917 = vpack.c.b16 %v853, %v853
        %v918 = vpack.c.b16 %v854, %v854
        %v919 = vpack.c.b16 %v855, %v855
        %v920 = vpack.c.b16 %v856, %v856
        %v921 = vpack.c.b16 %v857, %v857
        %v922 = vpack.c.b16 %v858, %v858
        %v923 = vpack.c.b16 %v859, %v859
        %v924 = vpack.c.b16 %v860, %v860
        %v925 = vpack.c.b16 %v861, %v861
        %v926 = vpack.c.b16 %v862, %v862
        %v927 = vpack.c.b16 %v863, %v863
        %v928 = vpack.c.b16 %v864, %v864
        %v929 = vpack.c.b16 %v865, %v865
        %v930 = vpack.c.b16 %v866, %v866
        %v931 = vpack.c.b16 %v867, %v867
        %v932 = vpack.c.b16 %v868, %v868
        %v933 = vpack.c.b16 %v869, %v869
        %v934 = vpack.c.b16 %v870, %v870
        %v935 = vpack.c.b16 %v871, %v871
        %v936 = vpack.c.b16 %v872, %v872
        %v937 = vpack.c.b16 %v873, %v873
        %v938 = vpack.c.b16 %v874, %v874
        %v939 = vpack.c.b16 %v875, %v875
        %v940 = vpack.c.b16 %v876, %v876
        %v941 = vpack.c.b16 %v877, %v877
        %v942 = vpack.c.b16 %v878, %v878
        %v943 = vpack.c.b16 %v879, %v879
        %v944 = vpack.c.b16 %v880, %v880
        %v945 = vpack.c.b16 %v881, %v881
        %v946 = vpack.c.b16 %v882, %v882
        %v947 = vpack.c.b16 %v883, %v883
        %v948 = vpack.c.b16 %v884, %v884
        %v949 = vpack.c.b16 %v885, %v885
        %v950 = vpack.c.b16 %v886, %v886
        %v951 = vpack.c.b16 %v887, %v887
        %v952 = vpack.c.b16 %v888, %v888
        %v953 = vpack.c.b16 %v889, %v889
        %v954 = vpack.c.b16 %v890, %v890
        %v955 = vpack.c.b16 %v891, %v891
        %v956 = vpack.c.b16 %v892, %v892
        %v957 = vpack.c.b16 %v893, %v893
        %v958 = vpack.c.b16 %v894, %v894
        %v959 = vpack.c.b16 %v895, %v895
        %v960 = vpack.c.b16 %v896, %v896
        %v961 = vpack.c.b16 %v897, %v897
        %v962 = vpack.c.b16 %v898, %v898
        %v963 = vpack.c.b16 %v899, %v899
        %v964 = vpack.c.b16 %v900, %v900
        %v965 = vpack.c.b16 %v901, %v901
        %v966 = vpack.c.b16 %v902, %v902
        %v967 = vpack.c.b16 %v903, %v903
        %v968 = vpack.c.b16 %v904, %v904
        %v969 = vpack.c.b16 %v905, %v905
        %v970 = vpack.c.b16 %v906, %v906
        %v971 = vpack.c.b16 %v907, %v907
        %v972 = vpack.c.b16 %v908, %v908
        %v973 = vpack.c.b16 %v909, %v909
        %v974 = vpack.c.b16 %v910, %v910
        %v975 = vpack.c.b16 %v911, %v911
        %1040 = vst [vmem:[%s227] sm:$0xf] %v912
        %1041 = vst [vmem:[%s227 + $0x4] sm:$0xf] %v913
        %1042 = vst [vmem:[%s227 + $0x8] sm:$0xf] %v914
        %1043 = vst [vmem:[%s227 + $0xc] sm:$0xf] %v915
        %1044 = vst [vmem:[%s227 + $0x10] sm:$0xf] %v916
        %1045 = vst [vmem:[%s227 + $0x14] sm:$0xf] %v917
        %1046 = vst [vmem:[%s227 + $0x18] sm:$0xf] %v918
        %1047 = vst [vmem:[%s227 + $0x1c] sm:$0xf] %v919
        %1048 = vst [vmem:[%s227 + $0x20] sm:$0xf] %v920
        %1049 = vst [vmem:[%s227 + $0x24] sm:$0xf] %v921
        %1050 = vst [vmem:[%s227 + $0x28] sm:$0xf] %v922
        %1051 = vst [vmem:[%s227 + $0x2c] sm:$0xf] %v923
        %1052 = vst [vmem:[%s227 + $0x30] sm:$0xf] %v924
        %1053 = vst [vmem:[%s227 + $0x34] sm:$0xf] %v925
        %1054 = vst [vmem:[%s227 + $0x38] sm:$0xf] %v926
        %1055 = vst [vmem:[%s227 + $0x3c] sm:$0xf] %v927
        %1056 = vst [vmem:[%s227 + $0x40] sm:$0xf] %v928
        %1057 = vst [vmem:[%s227 + $0x44] sm:$0xf] %v929
        %1058 = vst [vmem:[%s227 + $0x48] sm:$0xf] %v930
        %1059 = vst [vmem:[%s227 + $0x4c] sm:$0xf] %v931
        %1060 = vst [vmem:[%s227 + $0x50] sm:$0xf] %v932
        %1061 = vst [vmem:[%s227 + $0x54] sm:$0xf] %v933
        %1062 = vst [vmem:[%s227 + $0x58] sm:$0xf] %v934
        %1063 = vst [vmem:[%s227 + $0x5c] sm:$0xf] %v935
        %1064 = vst [vmem:[%s227 + $0x60] sm:$0xf] %v936
        %1065 = vst [vmem:[%s227 + $0x64] sm:$0xf] %v937
        %1066 = vst [vmem:[%s227 + $0x68] sm:$0xf] %v938
        %1067 = vst [vmem:[%s227 + $0x6c] sm:$0xf] %v939
        %1068 = vst [vmem:[%s227 + $0x70] sm:$0xf] %v940
        %1069 = vst [vmem:[%s227 + $0x74] sm:$0xf] %v941
        %1070 = vst [vmem:[%s227 + $0x78] sm:$0xf] %v942
        %1071 = vst [vmem:[%s227 + $0x7c] sm:$0xf] %v943
        %1072 = vst [vmem:[%s227 + $0x80] sm:$0xf] %v944
        %1073 = vst [vmem:[%s227 + $0x84] sm:$0xf] %v945
        %1074 = vst [vmem:[%s227 + $0x88] sm:$0xf] %v946
        %1075 = vst [vmem:[%s227 + $0x8c] sm:$0xf] %v947
        %1076 = vst [vmem:[%s227 + $0x90] sm:$0xf] %v948
        %1077 = vst [vmem:[%s227 + $0x94] sm:$0xf] %v949
        %1078 = vst [vmem:[%s227 + $0x98] sm:$0xf] %v950
        %1079 = vst [vmem:[%s227 + $0x9c] sm:$0xf] %v951
        %1080 = vst [vmem:[%s227 + $0xa0] sm:$0xf] %v952
        %1081 = vst [vmem:[%s227 + $0xa4] sm:$0xf] %v953
        %1082 = vst [vmem:[%s227 + $0xa8] sm:$0xf] %v954
        %1083 = vst [vmem:[%s227 + $0xac] sm:$0xf] %v955
        %1084 = vst [vmem:[%s227 + $0xb0] sm:$0xf] %v956
        %1085 = vst [vmem:[%s227 + $0xb4] sm:$0xf] %v957
        %1086 = vst [vmem:[%s227 + $0xb8] sm:$0xf] %v958
        %1087 = vst [vmem:[%s227 + $0xbc] sm:$0xf] %v959
        %1088 = vst [vmem:[%s227 + $0xc0] sm:$0xf] %v960
        %1089 = vst [vmem:[%s227 + $0xc4] sm:$0xf] %v961
        %1090 = vst [vmem:[%s227 + $0xc8] sm:$0xf] %v962
        %1091 = vst [vmem:[%s227 + $0xcc] sm:$0xf] %v963
        %1092 = vst [vmem:[%s227 + $0xd0] sm:$0xf] %v964
        %1093 = vst [vmem:[%s227 + $0xd4] sm:$0xf] %v965
        %1094 = vst [vmem:[%s227 + $0xd8] sm:$0xf] %v966
        %1095 = vst [vmem:[%s227 + $0xdc] sm:$0xf] %v967
        %1096 = vst [vmem:[%s227 + $0xe0] sm:$0xf] %v968
        %1097 = vst [vmem:[%s227 + $0xe4] sm:$0xf] %v969
        %1098 = vst [vmem:[%s227 + $0xe8] sm:$0xf] %v970
        %1099 = vst [vmem:[%s227 + $0xec] sm:$0xf] %v971
        %1100 = vst [vmem:[%s227 + $0xf0] sm:$0xf] %v972
        %1101 = vst [vmem:[%s227 + $0xf4] sm:$0xf] %v973
        %1102 = vst [vmem:[%s227 + $0xf8] sm:$0xf] %v974
        %1103 = vst [vmem:[%s227 + $0xfc] sm:$0xf] %v975
        %v1104 = vpack.c.bf16 %v472, %v468
        %v1105 = vpack.c.bf16 %v482, %v478
        %v1106 = vpack.c.bf16 %v492, %v488
        %v1107 = vpack.c.bf16 %v502, %v498
        %v1108 = vpack.c.bf16 %v512, %v508
        %v1109 = vpack.c.bf16 %v522, %v518
        %v1110 = vpack.c.bf16 %v532, %v528
        %v1111 = vpack.c.bf16 %v542, %v538
        %v1112 = vpack.c.bf16 %v552, %v548
        %v1113 = vpack.c.bf16 %v562, %v558
        %v1114 = vpack.c.bf16 %v572, %v568
        %v1115 = vpack.c.bf16 %v582, %v578
        %v1116 = vpack.c.bf16 %v592, %v588
        %v1117 = vpack.c.bf16 %v602, %v598
        %v1118 = vpack.c.bf16 %v612, %v608
        %v1119 = vpack.c.bf16 %v622, %v618
        %v1120 = vpack.c.bf16 %v632, %v628
        %v1121 = vpack.c.bf16 %v642, %v638
        %v1122 = vpack.c.bf16 %v652, %v648
        %v1123 = vpack.c.bf16 %v662, %v658
        %v1124 = vpack.c.bf16 %v672, %v668
        %v1125 = vpack.c.bf16 %v682, %v678
        %v1126 = vpack.c.bf16 %v692, %v688
        %v1127 = vpack.c.bf16 %v702, %v698
        %v1128 = vpack.c.bf16 %v712, %v708
        %v1129 = vpack.c.bf16 %v722, %v718
        %v1130 = vpack.c.bf16 %v732, %v728
        %v1131 = vpack.c.bf16 %v742, %v738
        %v1132 = vpack.c.bf16 %v752, %v748
        %v1133 = vpack.c.bf16 %v762, %v758
        %v1134 = vpack.c.bf16 %v772, %v768
        %v1135 = vpack.c.bf16 %v782, %v778
        %v1168 = vunpack.c.l.b16 %v1104
        %v1169 = vunpack.c.h.b16 %v1104
        %v1170 = vunpack.c.l.b16 %v1105
        %v1171 = vunpack.c.h.b16 %v1105
        %v1172 = vunpack.c.l.b16 %v1106
        %v1173 = vunpack.c.h.b16 %v1106
        %v1174 = vunpack.c.l.b16 %v1107
        %v1175 = vunpack.c.h.b16 %v1107
        %v1176 = vunpack.c.l.b16 %v1108
        %v1177 = vunpack.c.h.b16 %v1108
        %v1178 = vunpack.c.l.b16 %v1109
        %v1179 = vunpack.c.h.b16 %v1109
        %v1180 = vunpack.c.l.b16 %v1110
        %v1181 = vunpack.c.h.b16 %v1110
        %v1182 = vunpack.c.l.b16 %v1111
        %v1183 = vunpack.c.h.b16 %v1111
        %v1184 = vunpack.c.l.b16 %v1112
        %v1185 = vunpack.c.h.b16 %v1112
        %v1186 = vunpack.c.l.b16 %v1113
        %v1187 = vunpack.c.h.b16 %v1113
        %v1188 = vunpack.c.l.b16 %v1114
        %v1189 = vunpack.c.h.b16 %v1114
        %v1190 = vunpack.c.l.b16 %v1115
        %v1191 = vunpack.c.h.b16 %v1115
        %v1192 = vunpack.c.l.b16 %v1116
        %v1193 = vunpack.c.h.b16 %v1116
        %v1194 = vunpack.c.l.b16 %v1117
        %v1195 = vunpack.c.h.b16 %v1117
        %v1196 = vunpack.c.l.b16 %v1118
        %v1197 = vunpack.c.h.b16 %v1118
        %v1198 = vunpack.c.l.b16 %v1119
        %v1199 = vunpack.c.h.b16 %v1119
        %v1200 = vunpack.c.l.b16 %v1120
        %v1201 = vunpack.c.h.b16 %v1120
        %v1202 = vunpack.c.l.b16 %v1121
        %v1203 = vunpack.c.h.b16 %v1121
        %v1204 = vunpack.c.l.b16 %v1122
        %v1205 = vunpack.c.h.b16 %v1122
        %v1206 = vunpack.c.l.b16 %v1123
        %v1207 = vunpack.c.h.b16 %v1123
        %v1208 = vunpack.c.l.b16 %v1124
        %v1209 = vunpack.c.h.b16 %v1124
        %v1210 = vunpack.c.l.b16 %v1125
        %v1211 = vunpack.c.h.b16 %v1125
        %v1212 = vunpack.c.l.b16 %v1126
        %v1213 = vunpack.c.h.b16 %v1126
        %v1214 = vunpack.c.l.b16 %v1127
        %v1215 = vunpack.c.h.b16 %v1127
        %v1216 = vunpack.c.l.b16 %v1128
        %v1217 = vunpack.c.h.b16 %v1128
        %v1218 = vunpack.c.l.b16 %v1129
        %v1219 = vunpack.c.h.b16 %v1129
        %v1220 = vunpack.c.l.b16 %v1130
        %v1221 = vunpack.c.h.b16 %v1130
        %v1222 = vunpack.c.l.b16 %v1131
        %v1223 = vunpack.c.h.b16 %v1131
        %v1224 = vunpack.c.l.b16 %v1132
        %v1225 = vunpack.c.h.b16 %v1132
        %v1226 = vunpack.c.l.b16 %v1133
        %v1227 = vunpack.c.h.b16 %v1133
        %v1228 = vunpack.c.l.b16 %v1134
        %v1229 = vunpack.c.h.b16 %v1134
        %v1230 = vunpack.c.l.b16 %v1135
        %v1231 = vunpack.c.h.b16 %v1135
        %v1232 = vpack.c.b16 %v1168, %v1168
        %v1233 = vpack.c.b16 %v1169, %v1169
        %v1234 = vpack.c.b16 %v1170, %v1170
        %v1235 = vpack.c.b16 %v1171, %v1171
        %v1236 = vpack.c.b16 %v1172, %v1172
        %v1237 = vpack.c.b16 %v1173, %v1173
        %v1238 = vpack.c.b16 %v1174, %v1174
        %v1239 = vpack.c.b16 %v1175, %v1175
        %v1240 = vpack.c.b16 %v1176, %v1176
        %v1241 = vpack.c.b16 %v1177, %v1177
        %v1242 = vpack.c.b16 %v1178, %v1178
        %v1243 = vpack.c.b16 %v1179, %v1179
        %v1244 = vpack.c.b16 %v1180, %v1180
        %v1245 = vpack.c.b16 %v1181, %v1181
        %v1246 = vpack.c.b16 %v1182, %v1182
        %v1247 = vpack.c.b16 %v1183, %v1183
        %v1248 = vpack.c.b16 %v1184, %v1184
        %v1249 = vpack.c.b16 %v1185, %v1185
        %v1250 = vpack.c.b16 %v1186, %v1186
        %v1251 = vpack.c.b16 %v1187, %v1187
        %v1252 = vpack.c.b16 %v1188, %v1188
        %v1253 = vpack.c.b16 %v1189, %v1189
        %v1254 = vpack.c.b16 %v1190, %v1190
        %v1255 = vpack.c.b16 %v1191, %v1191
        %v1256 = vpack.c.b16 %v1192, %v1192
        %v1257 = vpack.c.b16 %v1193, %v1193
        %v1258 = vpack.c.b16 %v1194, %v1194
        %v1259 = vpack.c.b16 %v1195, %v1195
        %v1260 = vpack.c.b16 %v1196, %v1196
        %v1261 = vpack.c.b16 %v1197, %v1197
        %v1262 = vpack.c.b16 %v1198, %v1198
        %v1263 = vpack.c.b16 %v1199, %v1199
        %v1264 = vpack.c.b16 %v1200, %v1200
        %v1265 = vpack.c.b16 %v1201, %v1201
        %v1266 = vpack.c.b16 %v1202, %v1202
        %v1267 = vpack.c.b16 %v1203, %v1203
        %v1268 = vpack.c.b16 %v1204, %v1204
        %v1269 = vpack.c.b16 %v1205, %v1205
        %v1270 = vpack.c.b16 %v1206, %v1206
        %v1271 = vpack.c.b16 %v1207, %v1207
        %v1272 = vpack.c.b16 %v1208, %v1208
        %v1273 = vpack.c.b16 %v1209, %v1209
        %v1274 = vpack.c.b16 %v1210, %v1210
        %v1275 = vpack.c.b16 %v1211, %v1211
        %v1276 = vpack.c.b16 %v1212, %v1212
        %v1277 = vpack.c.b16 %v1213, %v1213
        %v1278 = vpack.c.b16 %v1214, %v1214
        %v1279 = vpack.c.b16 %v1215, %v1215
        %v1280 = vpack.c.b16 %v1216, %v1216
        %v1281 = vpack.c.b16 %v1217, %v1217
        %v1282 = vpack.c.b16 %v1218, %v1218
        %v1283 = vpack.c.b16 %v1219, %v1219
        %v1284 = vpack.c.b16 %v1220, %v1220
        %v1285 = vpack.c.b16 %v1221, %v1221
        %v1286 = vpack.c.b16 %v1222, %v1222
        %v1287 = vpack.c.b16 %v1223, %v1223
        %v1288 = vpack.c.b16 %v1224, %v1224
        %v1289 = vpack.c.b16 %v1225, %v1225
        %v1290 = vpack.c.b16 %v1226, %v1226
        %v1291 = vpack.c.b16 %v1227, %v1227
        %v1292 = vpack.c.b16 %v1228, %v1228
        %v1293 = vpack.c.b16 %v1229, %v1229
        %v1294 = vpack.c.b16 %v1230, %v1230
        %v1295 = vpack.c.b16 %v1231, %v1231
        %1360 = vst [vmem:[%s234] sm:$0xf] %v1232
        %1361 = vst [vmem:[%s234 + $0x4] sm:$0xf] %v1233
        %1362 = vst [vmem:[%s234 + $0x8] sm:$0xf] %v1234
        %1363 = vst [vmem:[%s234 + $0xc] sm:$0xf] %v1235
        %1364 = vst [vmem:[%s234 + $0x10] sm:$0xf] %v1236
        %1365 = vst [vmem:[%s234 + $0x14] sm:$0xf] %v1237
        %1366 = vst [vmem:[%s234 + $0x18] sm:$0xf] %v1238
        %1367 = vst [vmem:[%s234 + $0x1c] sm:$0xf] %v1239
        %1368 = vst [vmem:[%s234 + $0x20] sm:$0xf] %v1240
        %1369 = vst [vmem:[%s234 + $0x24] sm:$0xf] %v1241
        %1370 = vst [vmem:[%s234 + $0x28] sm:$0xf] %v1242
        %1371 = vst [vmem:[%s234 + $0x2c] sm:$0xf] %v1243
        %1372 = vst [vmem:[%s234 + $0x30] sm:$0xf] %v1244
        %1373 = vst [vmem:[%s234 + $0x34] sm:$0xf] %v1245
        %1374 = vst [vmem:[%s234 + $0x38] sm:$0xf] %v1246
        %1375 = vst [vmem:[%s234 + $0x3c] sm:$0xf] %v1247
        %1376 = vst [vmem:[%s234 + $0x40] sm:$0xf] %v1248
        %1377 = vst [vmem:[%s234 + $0x44] sm:$0xf] %v1249
        %1378 = vst [vmem:[%s234 + $0x48] sm:$0xf] %v1250
        %1379 = vst [vmem:[%s234 + $0x4c] sm:$0xf] %v1251
        %1380 = vst [vmem:[%s234 + $0x50] sm:$0xf] %v1252
        %1381 = vst [vmem:[%s234 + $0x54] sm:$0xf] %v1253
        %1382 = vst [vmem:[%s234 + $0x58] sm:$0xf] %v1254
        %1383 = vst [vmem:[%s234 + $0x5c] sm:$0xf] %v1255
        %1384 = vst [vmem:[%s234 + $0x60] sm:$0xf] %v1256
        %1385 = vst [vmem:[%s234 + $0x64] sm:$0xf] %v1257
        %1386 = vst [vmem:[%s234 + $0x68] sm:$0xf] %v1258
        %1387 = vst [vmem:[%s234 + $0x6c] sm:$0xf] %v1259
        %1388 = vst [vmem:[%s234 + $0x70] sm:$0xf] %v1260
        %1389 = vst [vmem:[%s234 + $0x74] sm:$0xf] %v1261
        %1390 = vst [vmem:[%s234 + $0x78] sm:$0xf] %v1262
        %1391 = vst [vmem:[%s234 + $0x7c] sm:$0xf] %v1263
        %1392 = vst [vmem:[%s234 + $0x80] sm:$0xf] %v1264
        %1393 = vst [vmem:[%s234 + $0x84] sm:$0xf] %v1265
        %1394 = vst [vmem:[%s234 + $0x88] sm:$0xf] %v1266
        %1395 = vst [vmem:[%s234 + $0x8c] sm:$0xf] %v1267
        %1396 = vst [vmem:[%s234 + $0x90] sm:$0xf] %v1268
        %1397 = vst [vmem:[%s234 + $0x94] sm:$0xf] %v1269
        %1398 = vst [vmem:[%s234 + $0x98] sm:$0xf] %v1270
        %1399 = vst [vmem:[%s234 + $0x9c] sm:$0xf] %v1271
        %1400 = vst [vmem:[%s234 + $0xa0] sm:$0xf] %v1272
        %1401 = vst [vmem:[%s234 + $0xa4] sm:$0xf] %v1273
        %1402 = vst [vmem:[%s234 + $0xa8] sm:$0xf] %v1274
        %1403 = vst [vmem:[%s234 + $0xac] sm:$0xf] %v1275
        %1404 = vst [vmem:[%s234 + $0xb0] sm:$0xf] %v1276
        %1405 = vst [vmem:[%s234 + $0xb4] sm:$0xf] %v1277
        %1406 = vst [vmem:[%s234 + $0xb8] sm:$0xf] %v1278
        %1407 = vst [vmem:[%s234 + $0xbc] sm:$0xf] %v1279
        %1408 = vst [vmem:[%s234 + $0xc0] sm:$0xf] %v1280
        %1409 = vst [vmem:[%s234 + $0xc4] sm:$0xf] %v1281
        %1410 = vst [vmem:[%s234 + $0xc8] sm:$0xf] %v1282
        %1411 = vst [vmem:[%s234 + $0xcc] sm:$0xf] %v1283
        %1412 = vst [vmem:[%s234 + $0xd0] sm:$0xf] %v1284
        %1413 = vst [vmem:[%s234 + $0xd4] sm:$0xf] %v1285
        %1414 = vst [vmem:[%s234 + $0xd8] sm:$0xf] %v1286
        %1415 = vst [vmem:[%s234 + $0xdc] sm:$0xf] %v1287
        %1416 = vst [vmem:[%s234 + $0xe0] sm:$0xf] %v1288
        %1417 = vst [vmem:[%s234 + $0xe4] sm:$0xf] %v1289
        %1418 = vst [vmem:[%s234 + $0xe8] sm:$0xf] %v1290
        %1419 = vst [vmem:[%s234 + $0xec] sm:$0xf] %v1291
        %1420 = vst [vmem:[%s234 + $0xf0] sm:$0xf] %v1292
        %1421 = vst [vmem:[%s234 + $0xf4] sm:$0xf] %v1293
        %1422 = vst [vmem:[%s234 + $0xf8] sm:$0xf] %v1294
        %1423 = vst [vmem:[%s234 + $0xfc] sm:$0xf] %v1295
        %s1424 = sand.u32 %s96, 1
        %s1425 = scalar_lea.sflag [#allocation4], %s1424
        %s1426 = sand.u32 %s96, 1
        %s1427 = smul.addr %s1426, 256
        %s1428 = scalar_lea.vmem [#allocation7], %s1427
        %s1429 = sand.u32 %s124, 1
        %s1430 = scalar_lea.sflag [#allocation9], %s1429
        %s1431 = sand.u32 %s124, 1
        %s1432 = smul.addr %s1431, 256
        %s1433 = scalar_lea.vmem [#allocation8], %s1432
        // Predicated region
        $region37: #{tpu_custom_call.1} parent=27 // pred_check
          %p1434 = pneg %p106
        $region38: #{tpu_custom_call.1} parent=27 // pred_check_branch
          %1436 = sbr.rel (%p1434) target = $region40
        $region39: #{tpu_custom_call.1} parent=27 // pred_region
          %s1437 = smul.u32 64, %s30
          %s1439 = ssub.s32 4096, 4096
          %1440 = vsyncadd %s1425, %s1439
          %s1441 = smul.addr %s29, 128
          %s1442 = sadd.s32 %s1437, %s1441
          %s1443 = smul.addr %s1442, 64
          %s1444 = scalar_lea.hbm %s2, %s1443
          %s1445 = sshll.u32 %s1428, 4
          %s1446 = int_to_ptr.vmem [resolvable:$true] %s1445
          %1451 = dma.vmem_to_hbm [thread:$0]  %s1446, 4096, %s1444, %s1425, 64, 64, 4
        $region40: #{tpu_custom_call.1} parent=27 // pred_fallthru
          _
        // Predicated region
        $region41: #{tpu_custom_call.1} parent=27 // pred_check
          %p1452 = pneg %p134
        $region42: #{tpu_custom_call.1} parent=27 // pred_check_branch
          %1454 = sbr.rel (%p1452) target = $region44
        $region43: #{tpu_custom_call.1} parent=27 // pred_region
          %s1455 = smul.u32 64, %s30
          %s1457 = ssub.s32 4096, 4096
          %1458 = vsyncadd %s1430, %s1457
          %s1459 = smul.addr %s29, 128
          %s1460 = sadd.s32 %s1455, %s1459
          %s1461 = smul.addr %s1460, 64
          %s1462 = scalar_lea.hbm %s3, %s1461
          %s1463 = sshll.u32 %s1433, 4
          %s1464 = int_to_ptr.vmem [resolvable:$true] %s1463
          %1469 = dma.vmem_to_hbm [thread:$0]  %s1464, 4096, %s1462, %s1430, 64, 64, 4
        $region44: #{tpu_custom_call.1} parent=27 // pred_fallthru
          _
      $region28: #{tpu_custom_call.1} parent=5 // pred_fallthru
        _
      %p1470 = scmp.le.s32.totalorder 2, %s20
      // Predicated region
      $region45: #{tpu_custom_call.1} parent=5 // pred_check
        %p1471 = pneg %p1470
      $region46: #{tpu_custom_call.1} parent=5 // pred_check_branch
        %1473 = sbr.rel (%p1471) target = $region48
      $region47: #{tpu_custom_call.1} parent=5 // pred_region
        %s1474 = ssub.s32 %s20, 2
        // Predicated region
        $region49: #{tpu_custom_call.1} parent=47 // pred_check
          %p1475 = pneg %p112
        $region50: #{tpu_custom_call.1} parent=47 // pred_check_branch
          %1477 = sbr.rel (%p1475) target = $region52
        $region51: #{tpu_custom_call.1} parent=47 // pred_region
          %s1478 = sand.u32 %s97, 1
          %s1479 = scalar_lea.sflag [#allocation4], %s1478
          %s1480 = sand.u32 %s97, 1
          %s1481 = smul.addr %s1480, 256
          %s1482 = scalar_lea.vmem [#allocation7], %s1481
          %1483 = dma.done %s1479, 4096
        $region52: #{tpu_custom_call.1} parent=47 // pred_fallthru
          _
        // Predicated region
        $region53: #{tpu_custom_call.1} parent=47 // pred_check
          %p1484 = pneg %p140
        $region54: #{tpu_custom_call.1} parent=47 // pred_check_branch
          %1486 = sbr.rel (%p1484) target = $region56
        $region55: #{tpu_custom_call.1} parent=47 // pred_region
          %s1487 = sand.u32 %s125, 1
          %s1488 = scalar_lea.sflag [#allocation9], %s1487
          %s1489 = sand.u32 %s125, 1
          %s1490 = smul.addr %s1489, 256
          %s1491 = scalar_lea.vmem [#allocation8], %s1490
          %1492 = dma.done %s1488, 4096
        $region56: #{tpu_custom_call.1} parent=47 // pred_fallthru
          _
      $region48: #{tpu_custom_call.1} parent=5 // pred_fallthru
        _
    $region6: #{tpu_custom_call.1} parent=1 // loop_footer
      %s24 = sadd.s32 1, %s20
    $region7: #{tpu_custom_call.1} parent=1 // loop_footer_branch
      %19 = sbr.rel target = $region3
    $region8: #{tpu_custom_call.1} parent=1 // loop_exit
      _
    %1493 = vsyncpa [#allocation3], 1
    %s1494 = scalar_lea.sflag [#allocation3], 1
    %1495 = vsyncpa %s1494, 1
    %1496 = vsyncpa [#allocation6], 1
    %1497 = vsyncpa [#allocation4], 1
    %s1498 = scalar_lea.sflag [#allocation4], 1
    %1499 = vsyncpa %s1498, 1
    %1500 = vsyncpa [#allocation9], 1
    %s1501 = scalar_lea.sflag [#allocation9], 1
    %1502 = vsyncpa %s1501, 1

</llo_original>
